<compile_context>
chip_gen: v5e
topology: v5e:2x2
jax: 0.10.0
libtpu: 0.0.40
codegen_flags: <defaults>
</compile_context>

<pallas_src>
import functools

import jax
import jax.numpy as jnp
from jax.experimental import pallas as pl
from jax.experimental.pallas import tpu as pltpu


def _round_up(x, m):
    return ((x + m - 1) // m) * m


def _folw_kernel(logits_ref, targets_ref, out_ref, *, gamma, label_smoothing,
                 num_valid, block_b, need_mask):
    """Per-block partial sums of the focal / ordinal / Wasserstein pieces.

    Layout: the C(=7) classes sit on the sublane axis, the batch on the
    128-wide lane axis, so every VPU/EUP/XLU op touches ~128 examples per
    vreg.  The block writes a lane-dense (1, 128) row of partial sums:
        lane 0: sum_i ce_i            (label-smoothed cross entropy)
        lane 1: sum_i (1 - pt_i)^g    (focal weights)
        lane 2: sum_i E_p|class - t_i| (ordinal == 1-D W1 vs one-hot target)
    """
    x = logits_ref[...].astype(jnp.float32)      # (C, TB)
    t = targets_ref[...]                         # (1, TB) int32
    C, TB = x.shape

    if need_mask:
        # Ragged tail: trailing lanes of the last block hold stale VMEM.
        # Sanitize the inputs *before* the softmax so NaN/Inf cannot leak
        # through exp/log, then exclude those columns from the partial sums.
        col = (pl.program_id(0) * block_b
               + jax.lax.broadcasted_iota(jnp.int32, (1, TB), 1))
        valid = col < num_valid                  # (1, TB) bool
        x = jnp.where(valid, x, 0.0)
        t = jnp.where(valid, t, 0)

    class_ids = jax.lax.broadcasted_iota(jnp.int32, (C, TB), 0)
    is_target = class_ids == t                   # bool mask, no float one-hot

    # Numerically stable softmax pieces; class-axis reductions are cheap
    # sublane (XLU) reductions over <= 8 rows.
    m = jnp.max(x, axis=0, keepdims=True)        # (1, TB)
    shifted = x - m
    ex = jnp.exp(shifted)                        # (C, TB) on the EUP
    denom = jnp.sum(ex, axis=0, keepdims=True)   # (1, TB)
    log_z = jnp.log(denom)
    inv_denom = 1.0 / denom                      # exact: pt/dist scale with it

    shifted_t = jnp.sum(jnp.where(is_target, shifted, 0.0),
                        axis=0, keepdims=True)   # (1, TB) == shifted[t]
    sum_shifted = jnp.sum(shifted, axis=0, keepdims=True)

    # Label-smoothed CE, algebraically simplified:
    #   ce_i = log_z - (1-ls)*shifted_t - (ls/C)*sum_shifted
    ls = label_smoothing
    ce_per = log_z - (1.0 - ls) * shifted_t - (ls / C) * sum_shifted

    # Focal weight (1 - pt)^gamma with pt = exp(shifted_t) / denom.  Uses one
    # narrow (1, TB) EUP exp instead of a (C, TB) select+multiply plus a
    # sublane reduce; switch back to the reduce form if EUP is the hot slot.
    pt = jnp.exp(shifted_t) * inv_denom
    one_m_pt = 1.0 - pt
    g = float(gamma)
    if g == 2.0:
        focal_w = one_m_pt * one_m_pt            # single VPU multiply, no pow
    elif g == int(g) and g >= 0.0:
        focal_w = jax.lax.integer_pow(one_m_pt, int(g))
    else:
        focal_w = jnp.power(jnp.maximum(one_m_pt, 0.0), g)

    # Ordinal expected distance E_p|class - target|; for a one-hot target this
    # equals the 1-D Wasserstein-1 distance, so it serves both loss terms.
    dist = jnp.abs(class_ids - t).astype(jnp.float32)
    dist_p = jnp.sum(dist * ex, axis=0, keepdims=True) * inv_denom

    if need_mask:
        ce_per = jnp.where(valid, ce_per, 0.0)
        focal_w = jnp.where(valid, focal_w, 0.0)
        dist_p = jnp.where(valid, dist_p, 0.0)

    s_ce = jnp.sum(ce_per)
    s_fw = jnp.sum(focal_w)
    s_dp = jnp.sum(dist_p)

    lane = jax.lax.broadcasted_iota(jnp.int32, (1, 128), 1)
    out_ref[...] = (jnp.where(lane == 0, s_ce, 0.0)
                    + jnp.where(lane == 1, s_fw, 0.0)
                    + jnp.where(lane == 2, s_dp, 0.0))


def focal_ordinal_wasserstein_loss(logits, targets, *, num_classes=7,
                                   alpha=0.25, gamma=2.0, ordinal_weight=0.3,
                                   wasserstein_weight=0.4, label_smoothing=0.1,
                                   block_b=32768):
    B, C = logits.shape
    assert C == num_classes

    # ---- batch tile (lane-dim) selection ------------------------------------
    #  * Small batch: one full-extent block (tb == B), no masking needed.
    #  * Otherwise a multiple of 128, capped by block_b, and sized so the grid
    #    has >= 2 blocks whenever B >= 256 -> "parallel" shards across both
    #    TensorCores on v7x (no-op on single-core v5e/v6e).
    #  * block_b=32768 -> ~1 MiB DMA per step (>> 0.35 us/step overhead) and a
    #    ~4 MiB double-buffered footprint, safely under v5e's 16 MiB default.
    if B < 256:
        tb = B
    else:
        tb = min(_round_up(block_b, 128), _round_up(pl.cdiv(B, 2), 128))
        tb = max(min(tb, 131072), 128)           # v5e scoped-VMEM guard
    num_blocks = pl.cdiv(B, tb)
    need_mask = (B % tb) != 0

    # (C, B): classes on sublanes, batch on lanes.  allow_input_fusion lets XLA
    # fold this transpose (and the targets reshape) into the pallas_call
    # operands instead of materializing them with an extra HBM round-trip.
    # No jnp.pad: the ragged tail is masked inside the kernel.
    logits_t = jnp.transpose(logits)                         # (C, B)
    targets_2d = targets.astype(jnp.int32).reshape(1, B)     # (1, B), free

    kernel = functools.partial(
        _folw_kernel, gamma=gamma, label_smoothing=label_smoothing,
        num_valid=B, block_b=tb, need_mask=need_mask)

    cost = pl.CostEstimate(
        flops=int(B * (10 * C + 16)),
        transcendentals=int(B * (C + 3)),
        bytes_accessed=int(B * (C * 4 + 4) + num_blocks * 128 * 4),
    )

    partials = pl.pallas_call(
        kernel,
        out_shape=jax.ShapeDtypeStruct((num_blocks, 128), jnp.float32),
        grid=(num_blocks,),
        in_specs=[pl.BlockSpec((C, tb), lambda i: (0, i)),
                  pl.BlockSpec((1, tb), lambda i: (0, i))],
        out_specs=pl.BlockSpec((1, 128), lambda i: (i, 0)),
        compiler_params=pltpu.CompilerParams(
            dimension_semantics=("parallel",),
            allow_input_fusion=[True, True],
            vmem_limit_bytes=32 * 1024 * 1024),
        cost_estimate=cost,
    )(logits_t, targets_2d)

    totals = jnp.sum(partials[:, :3], axis=0)
    inv_b = 1.0 / B
    ce = totals[0] * inv_b              # mean label-smoothed cross entropy
    mean_fw = totals[1] * inv_b         # mean focal weight (1 - pt)^gamma
    ordinal_loss = totals[2] * inv_b    # mean E_p|class - target|

    # Matches the reference: alpha * mean(fw) * (scalar CE).
    focal_loss = alpha * ce * mean_fw
    # W1 against a one-hot (point-mass) target is exactly the ordinal expected
    # distance, so it is reused instead of recomputed (no cumsum / tri-matrix).
    wasserstein_loss = ordinal_loss
    return (focal_loss
            + ordinal_weight * ordinal_loss
            + wasserstein_weight * wasserstein_loss)


def _reference(logits, targets, *, num_classes=7, alpha=0.25, gamma=2.0,
               ordinal_weight=0.3, wasserstein_weight=0.4, label_smoothing=0.1):
    """Pure-JAX reference mirroring the PyTorch forward literally."""
    B, C = logits.shape
    onehot = jax.nn.one_hot(targets, C, dtype=jnp.float32)
    log_probs = jax.nn.log_softmax(logits, axis=1)
    probs = jnp.exp(log_probs)
    smooth = onehot * (1.0 - label_smoothing) + label_smoothing / C
    ce = jnp.mean(-jnp.sum(smooth * log_probs, axis=1))
    pt = jnp.take_along_axis(probs, targets[:, None], axis=1)[:, 0]
    focal_loss = jnp.mean(alpha * (1.0 - pt) ** gamma * ce)
    dist = jnp.abs(jnp.arange(C, dtype=jnp.float32)[None, :]
                   - targets.astype(jnp.float32)[:, None])
    ordinal_loss = jnp.sum(dist * probs) / B
    wasserstein = jnp.mean(jnp.sum(
        jnp.abs(jnp.cumsum(probs, axis=1) - jnp.cumsum(onehot, axis=1)), axis=1))
    return focal_loss + ordinal_weight * ordinal_loss + wasserstein_weight * wasserstein


if __name__ == "__main__":
    key = jax.random.PRNGKey(0)
    k1, k2, k3, k4 = jax.random.split(key, 4)
    C = 7

    # Case 1: tiny batch -> single full-extent block, no masking.
    B1 = 8
    logits1 = jax.random.normal(k1, (B1, C), dtype=jnp.float32)
    targets1 = jax.random.randint(k2, (B1,), 0, C, dtype=jnp.int32)
    loss1 = jax.block_until_ready(focal_ordinal_wasserstein_loss(logits1, targets1))
    ref1 = _reference(logits1, targets1)
    if not jnp.allclose(loss1, ref1, rtol=1e-5, atol=1e-5):
        raise AssertionError(f"case1: kernel={loss1} reference={ref1}")

    # Case 2: multi-block grid + ragged tail (300 -> 3 blocks of 128, 44 valid
    # lanes in the last block) exercising the in-kernel sanitize/mask path.
    B2 = 300
    logits2 = jax.random.normal(k3, (B2, C), dtype=jnp.float32)
    targets2 = jax.random.randint(k4, (B2,), 0, C, dtype=jnp.int32)
    loss2 = jax.block_until_ready(
        focal_ordinal_wasserstein_loss(logits2, targets2, block_b=128))
    ref2 = _reference(logits2, targets2)
    if not jnp.allclose(loss2, ref2, rtol=1e-5, atol=1e-5):
        raise AssertionError(f"case2: kernel={loss2} reference={ref2}")

    # Case 3: default tiling path (>= 2 parallel blocks since B >= 256).
    loss3 = jax.block_until_ready(focal_ordinal_wasserstein_loss(logits2, targets2))
    if not jnp.allclose(loss3, ref2, rtol=1e-5, atol=1e-5):
        raise AssertionError(f"case3: kernel={loss3} reference={ref2}")

    print("KERNEL_OK")
</pallas_src>

<mosaic_0001>
module attributes {stable_mosaic.version = 11 : i64} {
  func.func @_folw_kernel(%arg0: i32, %arg1: memref<7x8xf32, #tpu.memory_space<vmem>>, %arg2: memref<1x8xi32, #tpu.memory_space<vmem>>, %arg3: memref<1x128xf32, #tpu.memory_space<vmem>>) attributes {dimension_semantics = [#tpu.dimension_semantics<parallel>], iteration_bounds = array<i64: 1>, scalar_prefetch = 0 : i64, scratch_operands = 0 : i64, tpu.core_type = #tpu.core_type<tc>, window_params = [{transform_indices = @transform_0, window_bounds = array<i64: 7, 8>}, {transform_indices = @transform_1, window_bounds = array<i64: 1, 8>}, {transform_indices = @transform_2, window_bounds = array<i64: 1, 128>}]} {
    %c0 = arith.constant 0 : index
    %c0_0 = arith.constant 0 : index
    %0 = vector.load %arg1[%c0, %c0_0] : memref<7x8xf32, #tpu.memory_space<vmem>>, vector<7x8xf32>
    %c0_1 = arith.constant 0 : index
    %c0_2 = arith.constant 0 : index
    %1 = vector.load %arg2[%c0_1, %c0_2] : memref<1x8xi32, #tpu.memory_space<vmem>>, vector<1x8xi32>
    %2 = tpu.iota {dimensions = array<i32: 0>} : vector<7x8xi32>
    %3 = vector.broadcast %1 : vector<1x8xi32> to vector<7x8xi32>
    %4 = arith.cmpi eq, %2, %3 : vector<7x8xi32>
    %cst = arith.constant dense<0xFF800000> : vector<8xf32>
    %5 = vector.multi_reduction <maximumf>, %0, %cst [0] : vector<7x8xf32> to vector<8xf32>
    %6 = vector.shape_cast %5 : vector<8xf32> to vector<1x8xf32>
    %7 = vector.broadcast %6 : vector<1x8xf32> to vector<7x8xf32>
    %8 = arith.subf %0, %7 : vector<7x8xf32>
    %9 = math.exp %8 : vector<7x8xf32>
    %cst_3 = arith.constant dense<0.000000e+00> : vector<8xf32>
    %10 = vector.multi_reduction <add>, %9, %cst_3 [0] : vector<7x8xf32> to vector<8xf32>
    %11 = vector.shape_cast %10 : vector<8xf32> to vector<1x8xf32>
    %12 = math.log %11 : vector<1x8xf32>
    %cst_4 = arith.constant 1.000000e+00 : f32
    %13 = vector.broadcast %cst_4 : f32 to vector<1x8xf32>
    %14 = arith.divf %13, %11 : vector<1x8xf32>
    %cst_5 = arith.constant 0.000000e+00 : f32
    %15 = vector.broadcast %cst_5 : f32 to vector<7x8xf32>
    %16 = arith.select %4, %8, %15 : vector<7x8xi1>, vector<7x8xf32>
    %cst_6 = arith.constant dense<0.000000e+00> : vector<8xf32>
    %17 = vector.multi_reduction <add>, %16, %cst_6 [0] : vector<7x8xf32> to vector<8xf32>
    %18 = vector.shape_cast %17 : vector<8xf32> to vector<1x8xf32>
    %cst_7 = arith.constant dense<0.000000e+00> : vector<8xf32>
    %19 = vector.multi_reduction <add>, %8, %cst_7 [0] : vector<7x8xf32> to vector<8xf32>
    %20 = vector.shape_cast %19 : vector<8xf32> to vector<1x8xf32>
    %cst_8 = arith.constant 0.899999976 : f32
    %21 = vector.broadcast %cst_8 : f32 to vector<1x8xf32>
    %22 = arith.mulf %21, %18 : vector<1x8xf32>
    %23 = arith.subf %12, %22 : vector<1x8xf32>
    %cst_9 = arith.constant 0.0142857144 : f32
    %24 = vector.broadcast %cst_9 : f32 to vector<1x8xf32>
    %25 = arith.mulf %24, %20 : vector<1x8xf32>
    %26 = arith.subf %23, %25 : vector<1x8xf32>
    %27 = math.exp %18 : vector<1x8xf32>
    %28 = arith.mulf %27, %14 : vector<1x8xf32>
    %cst_10 = arith.constant 1.000000e+00 : f32
    %29 = vector.broadcast %cst_10 : f32 to vector<1x8xf32>
    %30 = arith.subf %29, %28 : vector<1x8xf32>
    %31 = arith.mulf %30, %30 : vector<1x8xf32>
    %32 = vector.broadcast %1 : vector<1x8xi32> to vector<7x8xi32>
    %33 = arith.subi %2, %32 : vector<7x8xi32>
    %34 = math.absi %33 : vector<7x8xi32>
    %35 = arith.sitofp %34 : vector<7x8xi32> to vector<7x8xf32>
    %36 = arith.mulf %35, %9 : vector<7x8xf32>
    %cst_11 = arith.constant dense<0.000000e+00> : vector<8xf32>
    %37 = vector.multi_reduction <add>, %36, %cst_11 [0] : vector<7x8xf32> to vector<8xf32>
    %38 = vector.shape_cast %37 : vector<8xf32> to vector<1x8xf32>
    %39 = arith.mulf %38, %14 : vector<1x8xf32>
    %40 = vector.shape_cast %26 : vector<1x8xf32> to vector<1x1x8xf32>
    %cst_12 = arith.constant dense<0.000000e+00> : vector<1xf32>
    %41 = vector.multi_reduction <add>, %40, %cst_12 [1, 2] : vector<1x1x8xf32> to vector<1xf32>
    %42 = vector.shape_cast %41 : vector<1xf32> to vector<1x1x1xf32>
    %43 = vector.extract %42[0, 0, 0] : f32 from vector<1x1x1xf32>
    %44 = vector.shape_cast %31 : vector<1x8xf32> to vector<1x1x8xf32>
    %cst_13 = arith.constant dense<0.000000e+00> : vector<1xf32>
    %45 = vector.multi_reduction <add>, %44, %cst_13 [1, 2] : vector<1x1x8xf32> to vector<1xf32>
    %46 = vector.shape_cast %45 : vector<1xf32> to vector<1x1x1xf32>
    %47 = vector.extract %46[0, 0, 0] : f32 from vector<1x1x1xf32>
    %48 = vector.shape_cast %39 : vector<1x8xf32> to vector<1x1x8xf32>
    %cst_14 = arith.constant dense<0.000000e+00> : vector<1xf32>
    %49 = vector.multi_reduction <add>, %48, %cst_14 [1, 2] : vector<1x1x8xf32> to vector<1xf32>
    %50 = vector.shape_cast %49 : vector<1xf32> to vector<1x1x1xf32>
    %51 = vector.extract %50[0, 0, 0] : f32 from vector<1x1x1xf32>
    %52 = tpu.iota {dimensions = array<i32: 1>} : vector<1x128xi32>
    %c0_i32 = arith.constant 0 : i32
    %53 = vector.broadcast %c0_i32 : i32 to vector<1x128xi32>
    %54 = arith.cmpi eq, %52, %53 : vector<1x128xi32>
    %cst_15 = arith.constant 0.000000e+00 : f32
    %55 = vector.broadcast %43 : f32 to vector<1x128xf32>
    %56 = vector.broadcast %cst_15 : f32 to vector<1x128xf32>
    %57 = arith.select %54, %55, %56 : vector<1x128xi1>, vector<1x128xf32>
    %c1_i32 = arith.constant 1 : i32
    %58 = vector.broadcast %c1_i32 : i32 to vector<1x128xi32>
    %59 = arith.cmpi eq, %52, %58 : vector<1x128xi32>
    %cst_16 = arith.constant 0.000000e+00 : f32
    %60 = vector.broadcast %47 : f32 to vector<1x128xf32>
    %61 = vector.broadcast %cst_16 : f32 to vector<1x128xf32>
    %62 = arith.select %59, %60, %61 : vector<1x128xi1>, vector<1x128xf32>
    %63 = arith.addf %57, %62 : vector<1x128xf32>
    %c2_i32 = arith.constant 2 : i32
    %64 = vector.broadcast %c2_i32 : i32 to vector<1x128xi32>
    %65 = arith.cmpi eq, %52, %64 : vector<1x128xi32>
    %cst_17 = arith.constant 0.000000e+00 : f32
    %66 = vector.broadcast %51 : f32 to vector<1x128xf32>
    %67 = vector.broadcast %cst_17 : f32 to vector<1x128xf32>
    %68 = arith.select %65, %66, %67 : vector<1x128xi1>, vector<1x128xf32>
    %69 = arith.addf %63, %68 : vector<1x128xf32>
    %c0_18 = arith.constant 0 : index
    %c0_19 = arith.constant 0 : index
    %70 = vector.load %arg3[%c0_18, %c0_19] : memref<1x128xf32, #tpu.memory_space<vmem>>, vector<1x128xf32>
    tpu.vector_store %arg3[%c0_18, %c0_19], %69 {strides = array<i32>} : memref<1x128xf32, #tpu.memory_space<vmem>>, vector<1x128xf32>,
    return
  }
  func.func @transform_0(%arg0: i32) -> (i32, i32) {
    %c0_i32 = arith.constant 0 : i32
    %c0_i32_0 = arith.constant 0 : i32
    return %c0_i32, %arg0 : i32, i32
  }
  func.func @transform_1(%arg0: i32) -> (i32, i32) {
    %c0_i32 = arith.constant 0 : i32
    %c0_i32_0 = arith.constant 0 : i32
    return %c0_i32, %arg0 : i32, i32
  }
  func.func @transform_2(%arg0: i32) -> (i32, i32) {
    %c0_i32 = arith.constant 0 : i32
    %c0_i32_0 = arith.constant 0 : i32
    return %arg0, %c0_i32 : i32, i32
  }
}

</mosaic_0001>

<llo_original>
// kernel: tpu_custom_call.1
$region0: #{tpu_custom_call.1}
  #allocation0 [shape = 'u32[]', space=smem, size = 0x4, offset = 0x4, fixed_abs, tag = 'smem constant byte address 0x4 - core index']
  #allocation1 [shape = 'u32[72,128]{1,0:T(1,128)}', space=vmem, size = 0x9000, scoped, tag = 'internal scratch']
  %s0 = inlined_call_operand.hbm [shape: f32[7,8], index: 0, kind: input, shape index: {}]
  %s1 = inlined_call_operand.hbm [shape: s32[1,8], index: 1, kind: input, shape index: {}]
  %s2 = inlined_call_operand.hbm [shape: f32[1,128], index: 2, kind: output, shape index: {}]
  %s3 = sld [smem:[#allocation0]]
  $region26: #{tpu_custom_call.1} parent=0
    _
  %s5 = ssub.s32 1, %s3
  %s6 = scalar_select 0, %s5, %s3
  $region1: #{tpu_custom_call.1} parent=0
    #allocation2 [shape = 'u8[4096]{0}', space=vmem, size = 0x1000, scoped, tag = 'input window, operand 0, single buffered']
    #allocation3 [shape = 's32[1]{0}', space=sflag, size = 0x4, scoped, tag = 'scoped memory for tpu_custom_call.1']
    #allocation4 [shape = 's32[1]{0}', space=sflag, size = 0x4, scoped, tag = 'scoped memory for tpu_custom_call.1']
    #allocation5 [shape = 'u8[512]{0}', space=vmem, size = 0x400, scoped, tag = 'input window, operand 1, single buffered']
    #allocation6 [shape = 's32[1]{0}', space=sflag, size = 0x4, scoped, tag = 'scoped memory for tpu_custom_call.1']
    #allocation7 [shape = 'u8[512]{0}', space=vmem, size = 0x400, scoped, tag = 'output window, operand 0, single buffered']
    %7 = vsyncpa [#allocation3], 0
    %8 = vsyncpa [#allocation6], 0
    %9 = vsyncpa [#allocation4], 0
    // Predicated region
    $region2: #{tpu_custom_call.1} parent=1 // pred_check
      _
    $region3: #{tpu_custom_call.1} parent=1 // pred_check_branch
      %11 = sbr.rel (0) target = $region5
    $region4: #{tpu_custom_call.1} parent=1 // pred_region
      %13 = vsyncadd [#allocation3], 0
      %s15 = sshll.u32 %s0, 4
      %s16 = int_to_ptr.hbm [resolvable:$true] %s15
      %s17 = sshll.u32 [#allocation2], 4
      %s18 = int_to_ptr.vmem [resolvable:$true] %s17
      %20 = dma.hbm_to_vmem [thread:$0]  %s16, 128, %s18, [#allocation3]
    $region5: #{tpu_custom_call.1} parent=1 // pred_fallthru
      _
    // Predicated region
    $region6: #{tpu_custom_call.1} parent=1 // pred_check
      _
    $region7: #{tpu_custom_call.1} parent=1 // pred_check_branch
      %22 = sbr.rel (0) target = $region9
    $region8: #{tpu_custom_call.1} parent=1 // pred_region
      %24 = vsyncadd [#allocation6], 0
      %s26 = sshll.u32 %s1, 4
      %s27 = int_to_ptr.hbm [resolvable:$true] %s26
      %s28 = sshll.u32 [#allocation5], 4
      %s29 = int_to_ptr.vmem [resolvable:$true] %s28
      %31 = dma.hbm_to_vmem [thread:$0]  %s27, 16, %s29, [#allocation6]
    $region9: #{tpu_custom_call.1} parent=1 // pred_fallthru
      _
    // Predicated region
    $region10: #{tpu_custom_call.1} parent=1 // pred_check
      _
    $region11: #{tpu_custom_call.1} parent=1 // pred_check_branch
      %33 = sbr.rel (0) target = $region13
    $region12: #{tpu_custom_call.1} parent=1 // pred_region
      %35 = dma.done [#allocation3], 128
    $region13: #{tpu_custom_call.1} parent=1 // pred_fallthru
      _
    // Predicated region
    $region14: #{tpu_custom_call.1} parent=1 // pred_check
      _
    $region15: #{tpu_custom_call.1} parent=1 // pred_check_branch
      %37 = sbr.rel (0) target = $region17
    $region16: #{tpu_custom_call.1} parent=1 // pred_region
      %39 = dma.done [#allocation6], 16
    $region17: #{tpu_custom_call.1} parent=1 // pred_fallthru
      _
    %v40 = vld [vmem:[#allocation2] sm:$0x7f]
    %v41 = vld [vmem:[#allocation5] sm:$0x1]
    %v42 = vlaneseq
    %v43 = vshrl.u32 %v42, 7
    %v44 = vperm.slane %v41, 0
    %vm45 = vcmp.eq.s32.totalorder %v43, %v44
    %vm46 = vcmask 63488
    %v47 = vsel %vm46, %v40, -inf
    %v48 = vrot.slane %v47, 4
    %v49 = vmax.f32 %v47, %v48
    %v50 = vrot.slane %v49, 2
    %v51 = vmax.f32 %v49, %v50
    %v52 = vrot.slane %v51, 1
    %v53 = vmax.f32 %v51, %v52
    %v54 = vsub.f32 %v40, %v53
    %v55 = vmul.f32 %v54, 1.442695
    %v56 = vpow.pop %v55
    %v57 = vsel %vm46, %v56, 0.0
    %v58 = vrot.slane %v57, 4
    %v59 = vadd.f32 %v57, %v58
    %v60 = vrot.slane %v59, 2
    %v61 = vadd.f32 %v59, %v60
    %v62 = vrot.slane %v61, 1
    %v63 = vadd.f32 %v61, %v62
    %v64 = vlog2.pop %v63
    %v65 = vmul.f32 %v64, 0.6931472
    %v66 = vrcp.pop %v63
    %v67 = vmul.f32 %v63, %v66
    %v68 = vsub.f32 1.0, %v67
    %v69 = vmul.f32 %v66, %v68
    %v70 = vadd.f32 %v66, %v69
    %vm71 = vweird.f32 %v63
    %vm72 = vweird.f32 %v66
    %vm73 = vmor %vm71, %vm72
    %v74 = vsel %vm73, %v66, %v70
    %v75 = vand.u32 2147483647, %v63
    %vm76 = vcmp.eq.f32.partialorder %v75, 8.507059e+37
    %v77 = vand.u32 %v63, 2147483648
    %v78 = vor.u32 1.1754944e-38, %v77
    %v79 = vsel %vm76, %v78, %v74
    %v80 = vmul.f32 1.0, %v79
    %v81 = vsel %vm45, %v54, 0.0
    %v82 = vsel %vm46, %v81, 0.0
    %v83 = vrot.slane %v82, 4
    %v84 = vadd.f32 %v82, %v83
    %v85 = vrot.slane %v84, 2
    %v86 = vadd.f32 %v84, %v85
    %v87 = vrot.slane %v86, 1
    %v88 = vadd.f32 %v86, %v87
    %v89 = vsel %vm46, %v54, 0.0
    %v90 = vrot.slane %v89, 4
    %v91 = vadd.f32 %v89, %v90
    %v92 = vrot.slane %v91, 2
    %v93 = vadd.f32 %v91, %v92
    %v94 = vrot.slane %v93, 1
    %v95 = vadd.f32 %v93, %v94
    %v96 = vmul.f32 %v88, 0.9
    %v97 = vsub.f32 %v65, %v96
    %v98 = vmul.f32 %v95, 0.014285714
    %v99 = vsub.f32 %v97, %v98
    %v100 = vmul.f32 %v88, 1.442695
    %v101 = vpow.pop %v100
    %v102 = vmul.f32 %v101, %v80
    %v103 = vsub.f32 1.0, %v102
    %v104 = vmul.f32 %v103, %v103
    %v105 = vsub.s32 %v43, %v44
    %vm106 = vcmp.lt.s32.totalorder %v105, 0
    %v107 = vsub.s32 0, %v105
    %v108 = vsel %vm106, %v107, %v105
    %v109 = vcvt.s32.f32 %v108
    %v110 = vmul.f32 %v109, %v56
    %v111 = vsel %vm46, %v110, 0.0
    %v112 = vrot.slane %v111, 4
    %v113 = vadd.f32 %v111, %v112
    %v114 = vrot.slane %v113, 2
    %v115 = vadd.f32 %v113, %v114
    %v116 = vrot.slane %v115, 1
    %v117 = vadd.f32 %v115, %v116
    %v118 = vmul.f32 %v117, %v80
    %vm119 = vcmask 57344
    %v120 = vsel %vm119, %v99, 0.0
    %121 = vadd.xlane.f32.xlu0 %v120
    %v122 = vpop.xlane.xlu0 %121
    %v123 = vrot.slane %v122, 4
    %v124 = vadd.f32 %v122, %v123
    %v125 = vrot.slane %v124, 2
    %v126 = vadd.f32 %v124, %v125
    %v127 = vrot.slane %v126, 1
    %v128 = vadd.f32 %v126, %v127
    %s129 = vtos %v128
    %v130 = vsel %vm119, %v104, 0.0
    %131 = vadd.xlane.f32.xlu0 %v130
    %v132 = vpop.xlane.xlu0 %131
    %v133 = vrot.slane %v132, 4
    %v134 = vadd.f32 %v132, %v133
    %v135 = vrot.slane %v134, 2
    %v136 = vadd.f32 %v134, %v135
    %v137 = vrot.slane %v136, 1
    %v138 = vadd.f32 %v136, %v137
    %s139 = vtos %v138
    %v140 = vsel %vm119, %v118, 0.0
    %141 = vadd.xlane.f32.xlu0 %v140
    %v142 = vpop.xlane.xlu0 %141
    %v143 = vrot.slane %v142, 4
    %v144 = vadd.f32 %v142, %v143
    %v145 = vrot.slane %v144, 2
    %v146 = vadd.f32 %v144, %v145
    %v147 = vrot.slane %v146, 1
    %v148 = vadd.f32 %v146, %v147
    %s149 = vtos %v148
    %v150 = vlaneseq
    %v151 = vand.u32 %v150, 127
    %vm152 = vcmp.eq.s32.totalorder %v151, 0
    %v153 = vstv %s129
    %v154 = vsel %vm152, %v153, 0.0
    %vm155 = vcmp.eq.s32.totalorder %v151, 1
    %v156 = vstv %s139
    %v157 = vsel %vm155, %v156, 0.0
    %v158 = vadd.f32 %v154, %v157
    %vm159 = vcmp.eq.s32.totalorder %v151, 2
    %v160 = vstv %s149
    %v161 = vsel %vm159, %v160, 0.0
    %v162 = vadd.f32 %v158, %v161
    %163 = vst [vmem:[#allocation7] sm:$0x1] %v162
    // Predicated region
    $region18: #{tpu_custom_call.1} parent=1 // pred_check
      _
    $region19: #{tpu_custom_call.1} parent=1 // pred_check_branch
      %165 = sbr.rel (0) target = $region21
    $region20: #{tpu_custom_call.1} parent=1 // pred_region
      %167 = vsyncadd [#allocation4], 0
      %s169 = sshll.u32 [#allocation7], 4
      %s170 = int_to_ptr.vmem [resolvable:$true] %s169
      %s171 = sshll.u32 %s2, 4
      %s172 = int_to_ptr.hbm [resolvable:$true] %s171
      %174 = dma.vmem_to_hbm [thread:$0]  %s170, 16, %s172, [#allocation4]
    $region21: #{tpu_custom_call.1} parent=1 // pred_fallthru
      _
    // Predicated region
    $region22: #{tpu_custom_call.1} parent=1 // pred_check
      _
    $region23: #{tpu_custom_call.1} parent=1 // pred_check_branch
      %176 = sbr.rel (0) target = $region25
    $region24: #{tpu_custom_call.1} parent=1 // pred_region
      %178 = dma.done [#allocation4], 16
    $region25: #{tpu_custom_call.1} parent=1 // pred_fallthru
      _
    %179 = vsyncpa [#allocation3], 1
    %180 = vsyncpa [#allocation6], 1
    %181 = vsyncpa [#allocation4], 1

</llo_original>
